<compile_context>
chip_gen: v6e
topology: v6e:2x2x1
jax: 0.10.0
libtpu: 0.0.40
codegen_flags: <defaults>
</compile_context>

<pallas_src>
import functools

import numpy as np
import jax
import jax.numpy as jnp
from jax import lax
from jax.experimental import pallas as pl
from jax.experimental.pallas import tpu as pltpu


# ----------------------------------------------------------------------------
# helpers
# ----------------------------------------------------------------------------
def _round_up(x, m):
    return (x + m - 1) // m * m


def _pow(base, g):
    # gamma == 2 is the default focal exponent; use a multiply for exactness.
    if g == 2.0:
        return base * base
    return base ** g


# ----------------------------------------------------------------------------
# Pallas kernel: per-batch cost matrix, reduction over HW chunks
# ----------------------------------------------------------------------------
def _matcher_cost_kernel(cls_w, mask_w, dice_w, alpha, gamma, hw_true,
                         logits_ref, x_ref, toh_ref, tm_ref, tsum_ref,
                         c_ref, dot_acc, fn_acc, p_acc):
    k = pl.program_id(1)

    @pl.when(k == 0)
    def _init():
        dot_acc[...] = jnp.zeros_like(dot_acc)
        fn_acc[...] = jnp.zeros_like(fn_acc)
        p_acc[...] = jnp.zeros_like(p_acc)

    # ---- per-HW-chunk elementwise math (upcast to f32 right after load) ----
    x = x_ref[0].astype(jnp.float32)          # (Qp, tk)  predicted mask logits chunk
    t_m = tm_ref[0].astype(jnp.float32)       # (Tp, tk)  binary target-mask chunk (bf16 in HBM)

    prob = jax.nn.sigmoid(x)
    sp_pos = jax.nn.softplus(-x)              # BCE-with-logits, target = 1
    sp_neg = sp_pos + x                       # softplus(x) == softplus(-x) + x  (exact identity)
    fp = _pow(1.0 - prob, gamma) * sp_pos
    fn = _pow(prob, gamma) * sp_neg
    if alpha >= 0:                            # trace-time branch (alpha is a Python float)
        fp = fp * alpha
        fn = fn * (1.0 - alpha)

    # focal fold:  dot(fp, t) + dot(fn, 1 - t) == dot(fp - fn, t) + rowsum(fn)
    fd = fp - fn
    # single MXU pass against the shared RHS t_m (focal term + dice numerator)
    lhs = jnp.concatenate([fd, prob], axis=0)            # (2*Qp, tk)
    dn = (((1,), (1,)), ((), ()))                        # contract the last dims -> (2*Qp, Tp)
    dot_acc[...] += lax.dot_general(lhs, t_m, dn,
                                    preferred_element_type=jnp.float32)
    fn_acc[...] += jnp.sum(fn, axis=-1, keepdims=True)   # (Qp, 1)  XLU reduce
    p_acc[...] += jnp.sum(prob, axis=-1, keepdims=True)  # (Qp, 1)  XLU reduce

    # ---- finalize on the last HW chunk ----
    @pl.when(k == pl.num_programs(1) - 1)
    def _finalize():
        qp = fn_acc.shape[0]

        # cost_class = -softmax(logits)[:, tgt_ids]  (gather via one-hot matmul)
        logits = logits_ref[0].astype(jnp.float32)       # (Qp, Cp)
        t_oh = toh_ref[0].astype(jnp.float32)            # (Tp, Cp)
        z = logits - jnp.max(logits, axis=-1, keepdims=True)
        e = jnp.exp(z)
        prob_cls = e / jnp.sum(e, axis=-1, keepdims=True)
        cost_class = -lax.dot_general(prob_cls, t_oh, dn,
                                      preferred_element_type=jnp.float32)

        acc = dot_acc[...]
        m_dot = acc[:qp]                                 # (Qp, Tp)  dot(fp - fn, t_m)
        p_dot = acc[qp:]                                 # (Qp, Tp)  dot(prob, t_m)

        cost_mask = (m_dot + fn_acc[...]) * (1.0 / hw_true)

        denom = p_acc[...] + tsum_ref[0]                 # (Qp,1) + (1,Tp) -> (Qp,Tp)
        cost_dice = 1.0 - (2.0 * p_dot + 1.0) / (denom + 1.0)

        c_ref[0] = (mask_w * cost_mask + cls_w * cost_class
                    + dice_w * cost_dice).astype(c_ref.dtype)


def matcher_cost_matrix(pred_logits, pred_masks_flat, tgt_onehot, tgt_masks_flat,
                        cost_class=1.0, cost_mask=1.0, cost_dice=1.0,
                        alpha=0.25, gamma=2.0, tile_hw=None):
    """Returns the (B, Q, T) matching cost matrix computed by the Pallas kernel."""
    B, Q, Ccls = pred_logits.shape
    _, _, HW = pred_masks_flat.shape
    _, T, _ = tgt_onehot.shape

    # ---- TPU-friendly padding: sublane (8) / lane (128) alignment ----
    QP = _round_up(Q, 8)
    CP = _round_up(Ccls, 128)
    TP = _round_up(T, 128)                 # lane-dense output + aligned RHS sublanes
    if tile_hw is None:
        tile_hw = min(_round_up(HW, 128), 2048)
    tile_hw = _round_up(int(tile_hw), 128)
    HWP = _round_up(HW, tile_hw)
    nk = HWP // tile_hw

    f32 = jnp.float32
    # logits padded with a very negative value -> padded classes get ~0 softmax prob
    logits = jnp.pad(pred_logits.astype(f32),
                     ((0, 0), (0, QP - Q), (0, CP - Ccls)), constant_values=-1e9)
    # pred-mask logits padded with -20: sigmoid ~ 0 and focal_neg ~ 0, so padded
    # lanes/rows contribute ~0 to every accumulated term (padded rows get sliced off).
    x = jnp.pad(pred_masks_flat,
                ((0, 0), (0, QP - Q), (0, HWP - HW)), constant_values=-20.0)
    # targets are binary / one-hot -> exact in bf16; halves their HBM + VMEM traffic
    t_oh = jnp.pad(tgt_onehot.astype(jnp.bfloat16),
                   ((0, 0), (0, TP - T), (0, CP - Ccls)))
    t_m = jnp.pad(tgt_masks_flat.astype(jnp.bfloat16),
                  ((0, 0), (0, TP - T), (0, HWP - HW)))
    # per-target mask sums precomputed outside (replaces the in-kernel ones-matmul)
    t_sum = jnp.pad(jnp.sum(tgt_masks_flat.astype(f32), axis=-1),
                    ((0, 0), (0, TP - T)))[:, None, :]               # (B, 1, TP)

    kernel = functools.partial(
        _matcher_cost_kernel, float(cost_class), float(cost_mask),
        float(cost_dice), float(alpha), float(gamma), float(HW))

    c_pad = pl.pallas_call(
        kernel,
        out_shape=jax.ShapeDtypeStruct((B, QP, TP), f32),
        grid_spec=pltpu.PrefetchScalarGridSpec(
            num_scalar_prefetch=0,
            grid=(B, nk),
            in_specs=[
                pl.BlockSpec((1, QP, CP), lambda b, k: (b, 0, 0)),
                pl.BlockSpec((1, QP, tile_hw), lambda b, k: (b, 0, k)),
                pl.BlockSpec((1, TP, CP), lambda b, k: (b, 0, 0)),
                pl.BlockSpec((1, TP, tile_hw), lambda b, k: (b, 0, k)),
                pl.BlockSpec((1, 1, TP), lambda b, k: (b, 0, 0)),
            ],
            out_specs=pl.BlockSpec((1, QP, TP), lambda b, k: (b, 0, 0)),
            scratch_shapes=[
                pltpu.VMEM((2 * QP, TP), f32),   # [focal ; dice-numerator] dot accumulator
                pltpu.VMEM((QP, 1), f32),        # rowsum(focal_neg) accumulator
                pltpu.VMEM((QP, 1), f32),        # rowsum(prob) accumulator (dice denom)
            ]),
        compiler_params=pltpu.CompilerParams(
            dimension_semantics=("parallel", "arbitrary")),
    )(logits, x, t_oh, t_m, t_sum)

    return c_pad[:, :Q, :T]


# ----------------------------------------------------------------------------
# Host-side Hungarian assignment (replaces scipy.optimize.linear_sum_assignment)
# ----------------------------------------------------------------------------
# TODO(synk): linear_sum_assignment is an inherently sequential host-side
# algorithm with no clean Pallas/TPU equivalent; it runs in numpy on host.
def _hungarian_min(cost):
    """cost: (n, m) with n <= m. Returns the assigned column for each row."""
    cost = np.asarray(cost, dtype=np.float64)
    n, m = cost.shape
    INF = float("inf")
    u = np.zeros(n + 1)
    v = np.zeros(m + 1)
    p = np.zeros(m + 1, dtype=np.int64)    # p[j]: row matched to col j (1-indexed)
    way = np.zeros(m + 1, dtype=np.int64)
    for i in range(1, n + 1):
        p[0] = i
        j0 = 0
        minv = np.full(m + 1, INF)
        used = np.zeros(m + 1, dtype=bool)
        while True:
            used[j0] = True
            i0 = p[j0]
            delta = INF
            j1 = -1
            for j in range(1, m + 1):
                if not used[j]:
                    cur = cost[i0 - 1, j - 1] - u[i0] - v[j]
                    if cur < minv[j]:
                        minv[j] = cur
                        way[j] = j0
                    if minv[j] < delta:
                        delta = minv[j]
                        j1 = j
            for j in range(m + 1):
                if used[j]:
                    u[p[j]] += delta
                    v[j] -= delta
                else:
                    minv[j] -= delta
            j0 = j1
            if p[j0] == 0:
                break
        while True:
            j1 = way[j0]
            p[j0] = p[j1]
            j0 = j1
            if j0 == 0:
                break
    row_to_col = np.zeros(n, dtype=np.int64)
    for j in range(1, m + 1):
        if p[j] != 0:
            row_to_col[p[j] - 1] = j - 1
    return row_to_col


def linear_sum_assignment_np(cost):
    cost = np.asarray(cost)
    n, m = cost.shape
    if n <= m:
        cols = _hungarian_min(cost)
        return np.arange(n, dtype=np.int64), cols.astype(np.int64)
    rows = _hungarian_min(cost.T)          # rows[t] = row matched to column t
    order = np.argsort(rows, kind="stable")
    return rows[order].astype(np.int64), np.arange(m, dtype=np.int64)[order]


# ----------------------------------------------------------------------------
# Glue: nearest interpolation + the matcher module
# ----------------------------------------------------------------------------
def nearest_resize(masks, out_h, out_w):
    """PyTorch F.interpolate(mode='nearest') semantics: src = floor(dst * in/out)."""
    H_in, W_in = masks.shape[-2:]
    idx_h = (np.arange(out_h) * H_in) // out_h
    idx_w = (np.arange(out_w) * W_in) // out_w
    return masks[..., idx_h[:, None], idx_w[None, :]]


class HungarianMatcher:
    def __init__(self, cost_class=1.0, cost_mask=1.0, cost_dice=1.0):
        assert cost_class != 0 or cost_mask != 0 or cost_dice != 0, "all costs cant be 0"
        self.cost_class = cost_class
        self.cost_mask = cost_mask
        self.cost_dice = cost_dice

    def forward(self, outputs, targets):
        pred_logits = outputs["pred_logits"]            # (B, Q, C_cls)
        pred_masks = outputs["pred_masks"]              # (B, Q, H, W)
        B, Q, Ccls = pred_logits.shape
        H, W = pred_masks.shape[-2:]

        # NOTE: this synthetic version assumes every image has the same number of
        # targets T so the kernel can be batched; the reference matcher loops per image.
        tgt_masks = jnp.stack(
            [nearest_resize(t["masks"].astype(pred_masks.dtype), H, W) for t in targets])
        tgt_onehot = jnp.stack(
            [jax.nn.one_hot(t["labels"], Ccls, dtype=jnp.float32) for t in targets])
        T = tgt_onehot.shape[1]

        C = matcher_cost_matrix(
            pred_logits,
            pred_masks.reshape(B, Q, H * W),
            tgt_onehot,
            tgt_masks.reshape(B, T, H * W),
            cost_class=self.cost_class,
            cost_mask=self.cost_mask,
            cost_dice=self.cost_dice,
        )
        C = np.asarray(jax.block_until_ready(C))
        return [linear_sum_assignment_np(C[b]) for b in range(B)], C


# ----------------------------------------------------------------------------
# Pure-JAX reference (for correctness check of the kernel output)
# ----------------------------------------------------------------------------
def reference_cost(pred_logits, masks_flat, tgt_onehot, tgt_masks_flat,
                   cost_class=1.0, cost_mask=1.0, cost_dice=1.0,
                   alpha=0.25, gamma=2.0):
    out_prob = jax.nn.softmax(pred_logits.astype(jnp.float32), axis=-1)
    c_class = -jnp.einsum("bqc,btc->bqt", out_prob, tgt_onehot)

    x = masks_flat.astype(jnp.float32)
    t = tgt_masks_flat.astype(jnp.float32)
    prob = jax.nn.sigmoid(x)
    focal_pos = _pow(1.0 - prob, gamma) * jax.nn.softplus(-x) * alpha
    focal_neg = _pow(prob, gamma) * jax.nn.softplus(x) * (1.0 - alpha)
    hw = x.shape[-1]
    c_mask = (jnp.einsum("bqk,btk->bqt", focal_pos, t)
              + jnp.einsum("bqk,btk->bqt", focal_neg, 1.0 - t)) / hw

    numerator = 2.0 * jnp.einsum("bqk,btk->bqt", prob, t)
    denominator = prob.sum(-1)[:, :, None] + t.sum(-1)[:, None, :]
    c_dice = 1.0 - (numerator + 1.0) / (denominator + 1.0)

    return cost_mask * c_mask + cost_class * c_class + cost_dice * c_dice


# ----------------------------------------------------------------------------
if __name__ == "__main__":
    B, Q, Ccls = 2, 8, 16      # batch, num_queries, num_classes (+ no-object slot)
    H, W = 16, 16              # predicted mask resolution
    T = 4                      # targets per image
    Hgt, Wgt = 24, 24          # ground-truth mask resolution (resized by nearest)

    key = jax.random.PRNGKey(0)
    k1, k2, k3, k4 = jax.random.split(key, 4)

    pred_logits = jax.random.normal(k1, (B, Q, Ccls), dtype=jnp.float32)
    pred_masks = jax.random.normal(k2, (B, Q, H, W), dtype=jnp.float32)
    tgt_labels = jax.random.randint(k3, (B, T), 0, Ccls - 1)
    tgt_masks = (jax.random.uniform(k4, (B, T, Hgt, Wgt)) > 0.5).astype(jnp.float32)

    outputs = {"pred_logits": pred_logits, "pred_masks": pred_masks}
    targets = [{"labels": tgt_labels[b], "masks": tgt_masks[b]} for b in range(B)]

    matcher = HungarianMatcher(cost_class=1.0, cost_mask=1.0, cost_dice=1.0)
    indices, C_kernel = matcher.forward(outputs, targets)

    # correctness check of the Pallas-computed cost matrix vs a plain-JAX reference
    tgt_masks_rs = jnp.stack(
        [nearest_resize(t["masks"], H, W) for t in targets]).reshape(B, T, H * W)
    tgt_oh = jnp.stack(
        [jax.nn.one_hot(t["labels"], Ccls, dtype=jnp.float32) for t in targets])
    C_ref = reference_cost(pred_logits, pred_masks.reshape(B, Q, H * W),
                           tgt_oh, tgt_masks_rs)
    C_ref = np.asarray(jax.block_until_ready(C_ref))

    assert C_kernel.shape == (B, Q, T)
    assert np.all(np.isfinite(C_kernel))
    np.testing.assert_allclose(C_kernel, C_ref, rtol=1e-4, atol=1e-4)

    # also exercise the multi-chunk HW-reduction path (tile_hw=128 -> 2 reduction steps)
    C_tiled = matcher_cost_matrix(pred_logits, pred_masks.reshape(B, Q, H * W),
                                  tgt_oh, tgt_masks_rs, tile_hw=128)
    C_tiled = np.asarray(jax.block_until_ready(C_tiled))
    np.testing.assert_allclose(C_tiled, C_ref, rtol=1e-4, atol=1e-4)

    # sanity on the assignment output structure (matches reference semantics)
    for (i, j) in indices:
        assert len(i) == len(j) == min(Q, T)
        assert i.dtype == np.int64 and j.dtype == np.int64

    print("KERNEL_OK")
</pallas_src>

<mosaic_0001>
module attributes {stable_mosaic.version = 11 : i64} {
  func.func @_matcher_cost_kernel(%arg0: i32, %arg1: i32, %arg2: memref<1x8x128xf32, #tpu.memory_space<vmem>>, %arg3: memref<1x8x256xf32, #tpu.memory_space<vmem>>, %arg4: memref<1x128x128xbf16, #tpu.memory_space<vmem>>, %arg5: memref<1x128x256xbf16, #tpu.memory_space<vmem>>, %arg6: memref<1x1x128xf32, #tpu.memory_space<vmem>>, %arg7: memref<1x8x128xf32, #tpu.memory_space<vmem>>, %arg8: memref<16x128xf32, #tpu.memory_space<vmem>>, %arg9: memref<8x1xf32, #tpu.memory_space<vmem>>, %arg10: memref<8x1xf32, #tpu.memory_space<vmem>>) attributes {dimension_semantics = [#tpu.dimension_semantics<parallel>, #tpu.dimension_semantics<arbitrary>], iteration_bounds = array<i64: 2, 1>, scalar_prefetch = 0 : i64, scratch_operands = 3 : i64, tpu.core_type = #tpu.core_type<tc>, window_params = [{transform_indices = @transform_0, window_bounds = array<i64: 1, 8, 128>}, {transform_indices = @transform_1, window_bounds = array<i64: 1, 8, 256>}, {transform_indices = @transform_2, window_bounds = array<i64: 1, 128, 128>}, {transform_indices = @transform_3, window_bounds = array<i64: 1, 128, 256>}, {transform_indices = @transform_4, window_bounds = array<i64: 1, 1, 128>}, {transform_indices = @transform_5, window_bounds = array<i64: 1, 8, 128>}]} {
    %c0_i32 = arith.constant 0 : i32
    %0 = arith.cmpi eq, %arg1, %c0_i32 : i32
    %1 = arith.extui %0 : i1 to i32
    %c0_i32_0 = arith.constant 0 : i32
    %2 = arith.cmpi ne, %1, %c0_i32_0 : i32
    scf.if %2 {
      %cst_29 = arith.constant 0.000000e+00 : f32
      %59 = vector.broadcast %cst_29 : f32 to vector<16x128xf32>
      %c0_30 = arith.constant 0 : index
      %c0_31 = arith.constant 0 : index
      %60 = vector.load %arg8[%c0_30, %c0_31] : memref<16x128xf32, #tpu.memory_space<vmem>>, vector<16x128xf32>
      tpu.vector_store %arg8[%c0_30, %c0_31], %59 {strides = array<i32>} : memref<16x128xf32, #tpu.memory_space<vmem>>, vector<16x128xf32>,
      %cst_32 = arith.constant 0.000000e+00 : f32
      %61 = vector.broadcast %cst_32 : f32 to vector<8x1xf32>
      %c0_33 = arith.constant 0 : index
      %c0_34 = arith.constant 0 : index
      %62 = vector.load %arg9[%c0_33, %c0_34] : memref<8x1xf32, #tpu.memory_space<vmem>>, vector<8x1xf32>
      tpu.vector_store %arg9[%c0_33, %c0_34], %61 {strides = array<i32>} : memref<8x1xf32, #tpu.memory_space<vmem>>, vector<8x1xf32>,
      %cst_35 = arith.constant 0.000000e+00 : f32
      %63 = vector.broadcast %cst_35 : f32 to vector<8x1xf32>
      %c0_36 = arith.constant 0 : index
      %c0_37 = arith.constant 0 : index
      %64 = vector.load %arg10[%c0_36, %c0_37] : memref<8x1xf32, #tpu.memory_space<vmem>>, vector<8x1xf32>
      tpu.vector_store %arg10[%c0_36, %c0_37], %63 {strides = array<i32>} : memref<8x1xf32, #tpu.memory_space<vmem>>, vector<8x1xf32>,
    } else {
    }
    %c0 = arith.constant 0 : index
    %c0_1 = arith.constant 0 : index
    %c0_2 = arith.constant 0 : index
    %3 = vector.load %arg3[%c0, %c0_1, %c0_2] : memref<1x8x256xf32, #tpu.memory_space<vmem>>, vector<1x8x256xf32>
    %4 = vector.shape_cast %3 : vector<1x8x256xf32> to vector<8x256xf32>
    %c0_3 = arith.constant 0 : index
    %c0_4 = arith.constant 0 : index
    %c0_5 = arith.constant 0 : index
    %5 = vector.load %arg5[%c0_3, %c0_4, %c0_5] : memref<1x128x256xbf16, #tpu.memory_space<vmem>>, vector<1x128x256xbf16>
    %6 = vector.shape_cast %5 : vector<1x128x256xbf16> to vector<128x256xbf16>
    %7 = arith.extf %6 : vector<128x256xbf16> to vector<128x256xf32>
    %8 = arith.negf %4 : vector<8x256xf32>
    %9 = math.exp %8 : vector<8x256xf32>
    %cst = arith.constant 1.000000e+00 : f32
    %10 = vector.broadcast %cst : f32 to vector<8x256xf32>
    %11 = arith.addf %10, %9 : vector<8x256xf32>
    %12 = arith.divf %10, %11 : vector<8x256xf32>
    %cst_6 = arith.constant 0.000000e+00 : f32
    %13 = vector.broadcast %cst_6 : f32 to vector<8x256xf32>
    %14 = arith.subf %13, %4 : vector<8x256xf32>
    %cst_7 = arith.constant 0.000000e+00 : f32
    %15 = vector.broadcast %cst_7 : f32 to vector<8x256xf32>
    %16 = arith.maximumf %14, %15 : vector<8x256xf32>
    %17 = vector.broadcast %cst_7 : f32 to vector<8x256xf32>
    %18 = arith.subf %14, %17 : vector<8x256xf32>
    %19 = arith.cmpf one, %18, %18 : vector<8x256xf32>
    %20 = vector.broadcast %cst_7 : f32 to vector<8x256xf32>
    %21 = arith.addf %14, %20 : vector<8x256xf32>
    %22 = math.absf %18 : vector<8x256xf32>
    %cst_8 = arith.constant 0.000000e+00 : f32
    %23 = vector.broadcast %cst_8 : f32 to vector<8x256xf32>
    %24 = arith.subf %23, %22 : vector<8x256xf32>
    %25 = math.exp %24 : vector<8x256xf32>
    %26 = math.log1p %25 : vector<8x256xf32>
    %27 = arith.addf %16, %26 : vector<8x256xf32>
    %28 = arith.select %19, %21, %27 : vector<8x256xi1>, vector<8x256xf32>
    %29 = arith.addf %28, %4 : vector<8x256xf32>
    %cst_9 = arith.constant 1.000000e+00 : f32
    %30 = vector.broadcast %cst_9 : f32 to vector<8x256xf32>
    %31 = arith.subf %30, %12 : vector<8x256xf32>
    %32 = arith.mulf %31, %31 : vector<8x256xf32>
    %33 = arith.mulf %32, %28 : vector<8x256xf32>
    %34 = arith.mulf %12, %12 : vector<8x256xf32>
    %35 = arith.mulf %34, %29 : vector<8x256xf32>
    %cst_10 = arith.constant 2.500000e-01 : f32
    %36 = vector.broadcast %cst_10 : f32 to vector<8x256xf32>
    %37 = arith.mulf %33, %36 : vector<8x256xf32>
    %cst_11 = arith.constant 7.500000e-01 : f32
    %38 = vector.broadcast %cst_11 : f32 to vector<8x256xf32>
    %39 = arith.mulf %35, %38 : vector<8x256xf32>
    %40 = arith.subf %37, %39 : vector<8x256xf32>
    %41 = tpu.concatenate %40, %12 in 0 : vector<8x256xf32>, vector<8x256xf32> -> vector<16x256xf32>
    %c0_12 = arith.constant 0 : index
    %c0_13 = arith.constant 0 : index
    %42 = vector.load %arg8[%c0_12, %c0_13] : memref<16x128xf32, #tpu.memory_space<vmem>>, vector<16x128xf32>
    %cst_14 = arith.constant dense<0.000000e+00> : vector<16x128xf32>
    %43 = tpu.matmul %41, %7, %cst_14 {dimension_numbers = #tpu.dot_dimension_numbers<[1], [1], [0], [0], [0, 0, 1, 0], [], []>} : vector<16x256xf32>, vector<128x256xf32>, vector<16x128xf32> -> vector<16x128xf32>
    %44 = arith.addf %42, %43 : vector<16x128xf32>
    %c0_15 = arith.constant 0 : index
    %c0_16 = arith.constant 0 : index
    %45 = vector.load %arg8[%c0_15, %c0_16] : memref<16x128xf32, #tpu.memory_space<vmem>>, vector<16x128xf32>
    tpu.vector_store %arg8[%c0_15, %c0_16], %44 {strides = array<i32>} : memref<16x128xf32, #tpu.memory_space<vmem>>, vector<16x128xf32>,
    %c0_17 = arith.constant 0 : index
    %c0_18 = arith.constant 0 : index
    %46 = vector.load %arg9[%c0_17, %c0_18] : memref<8x1xf32, #tpu.memory_space<vmem>>, vector<8x1xf32>
    %cst_19 = arith.constant dense<0.000000e+00> : vector<8xf32>
    %47 = vector.multi_reduction <add>, %39, %cst_19 [1] : vector<8x256xf32> to vector<8xf32>
    %48 = vector.shape_cast %47 : vector<8xf32> to vector<8x1xf32>
    %49 = arith.addf %46, %48 : vector<8x1xf32>
    %c0_20 = arith.constant 0 : index
    %c0_21 = arith.constant 0 : index
    %50 = vector.load %arg9[%c0_20, %c0_21] : memref<8x1xf32, #tpu.memory_space<vmem>>, vector<8x1xf32>
    tpu.vector_store %arg9[%c0_20, %c0_21], %49 {strides = array<i32>} : memref<8x1xf32, #tpu.memory_space<vmem>>, vector<8x1xf32>,
    %c0_22 = arith.constant 0 : index
    %c0_23 = arith.constant 0 : index
    %51 = vector.load %arg10[%c0_22, %c0_23] : memref<8x1xf32, #tpu.memory_space<vmem>>, vector<8x1xf32>
    %cst_24 = arith.constant dense<0.000000e+00> : vector<8xf32>
    %52 = vector.multi_reduction <add>, %12, %cst_24 [1] : vector<8x256xf32> to vector<8xf32>
    %53 = vector.shape_cast %52 : vector<8xf32> to vector<8x1xf32>
    %54 = arith.addf %51, %53 : vector<8x1xf32>
    %c0_25 = arith.constant 0 : index
    %c0_26 = arith.constant 0 : index
    %55 = vector.load %arg10[%c0_25, %c0_26] : memref<8x1xf32, #tpu.memory_space<vmem>>, vector<8x1xf32>
    tpu.vector_store %arg10[%c0_25, %c0_26], %54 {strides = array<i32>} : memref<8x1xf32, #tpu.memory_space<vmem>>, vector<8x1xf32>,
    %c0_i32_27 = arith.constant 0 : i32
    %56 = arith.cmpi eq, %arg1, %c0_i32_27 : i32
    %57 = arith.extui %56 : i1 to i32
    %c0_i32_28 = arith.constant 0 : i32
    %58 = arith.cmpi ne, %57, %c0_i32_28 : i32
    scf.if %58 {
      %c0_29 = arith.constant 0 : index
      %c0_30 = arith.constant 0 : index
      %c0_31 = arith.constant 0 : index
      %59 = vector.load %arg2[%c0_29, %c0_30, %c0_31] : memref<1x8x128xf32, #tpu.memory_space<vmem>>, vector<1x8x128xf32>
      %60 = vector.shape_cast %59 : vector<1x8x128xf32> to vector<8x128xf32>
      %c0_32 = arith.constant 0 : index
      %c0_33 = arith.constant 0 : index
      %c0_34 = arith.constant 0 : index
      %61 = vector.load %arg4[%c0_32, %c0_33, %c0_34] : memref<1x128x128xbf16, #tpu.memory_space<vmem>>, vector<1x128x128xbf16>
      %62 = vector.shape_cast %61 : vector<1x128x128xbf16> to vector<128x128xbf16>
      %63 = arith.extf %62 : vector<128x128xbf16> to vector<128x128xf32>
      %cst_35 = arith.constant dense<0xFF800000> : vector<8xf32>
      %64 = vector.multi_reduction <maximumf>, %60, %cst_35 [1] : vector<8x128xf32> to vector<8xf32>
      %65 = vector.shape_cast %64 : vector<8xf32> to vector<8x1xf32>
      %66 = vector.broadcast %65 : vector<8x1xf32> to vector<8x128xf32>
      %67 = arith.subf %60, %66 : vector<8x128xf32>
      %68 = math.exp %67 : vector<8x128xf32>
      %cst_36 = arith.constant dense<0.000000e+00> : vector<8xf32>
      %69 = vector.multi_reduction <add>, %68, %cst_36 [1] : vector<8x128xf32> to vector<8xf32>
      %70 = vector.shape_cast %69 : vector<8xf32> to vector<8x1xf32>
      %71 = vector.broadcast %70 : vector<8x1xf32> to vector<8x128xf32>
      %72 = arith.divf %68, %71 : vector<8x128xf32>
      %cst_37 = arith.constant dense<0.000000e+00> : vector<8x128xf32>
      %73 = tpu.matmul %72, %63, %cst_37 {dimension_numbers = #tpu.dot_dimension_numbers<[1], [1], [0], [0], [0, 0, 1, 0], [], []>} : vector<8x128xf32>, vector<128x128xf32>, vector<8x128xf32> -> vector<8x128xf32>
      %cst_38 = arith.constant 0.000000e+00 : f32
      %74 = vector.broadcast %cst_38 : f32 to vector<8x128xf32>
      %75 = arith.subf %74, %73 : vector<8x128xf32>
      %c0_39 = arith.constant 0 : index
      %c0_40 = arith.constant 0 : index
      %76 = vector.load %arg8[%c0_39, %c0_40] : memref<16x128xf32, #tpu.memory_space<vmem>>, vector<16x128xf32>
      %77 = vector.extract_strided_slice %76 {offsets = [0, 0], sizes = [8, 128], strides = [1, 1]} : vector<16x128xf32> to vector<8x128xf32>
      %78 = vector.extract_strided_slice %76 {offsets = [8, 0], sizes = [8, 128], strides = [1, 1]} : vector<16x128xf32> to vector<8x128xf32>
      %c0_41 = arith.constant 0 : index
      %c0_42 = arith.constant 0 : index
      %79 = vector.load %arg9[%c0_41, %c0_42] : memref<8x1xf32, #tpu.memory_space<vmem>>, vector<8x1xf32>
      %80 = vector.broadcast %79 : vector<8x1xf32> to vector<8x128xf32>
      %81 = arith.addf %77, %80 : vector<8x128xf32>
      %cst_43 = arith.constant 3.906250e-03 : f32
      %82 = vector.broadcast %cst_43 : f32 to vector<8x128xf32>
      %83 = arith.mulf %81, %82 : vector<8x128xf32>
      %c0_44 = arith.constant 0 : index
      %c0_45 = arith.constant 0 : index
      %84 = vector.load %arg10[%c0_44, %c0_45] : memref<8x1xf32, #tpu.memory_space<vmem>>, vector<8x1xf32>
      %c0_46 = arith.constant 0 : index
      %c0_47 = arith.constant 0 : index
      %c0_48 = arith.constant 0 : index
      %85 = vector.load %arg6[%c0_46, %c0_47, %c0_48] : memref<1x1x128xf32, #tpu.memory_space<vmem>>, vector<1x1x128xf32>
      %86 = vector.shape_cast %85 : vector<1x1x128xf32> to vector<1x128xf32>
      %87 = vector.broadcast %84 : vector<8x1xf32> to vector<8x128xf32>
      %88 = vector.broadcast %86 : vector<1x128xf32> to vector<8x128xf32>
      %89 = arith.addf %87, %88 : vector<8x128xf32>
      %cst_49 = arith.constant 2.000000e+00 : f32
      %90 = vector.broadcast %cst_49 : f32 to vector<8x128xf32>
      %91 = arith.mulf %90, %78 : vector<8x128xf32>
      %cst_50 = arith.constant 1.000000e+00 : f32
      %92 = vector.broadcast %cst_50 : f32 to vector<8x128xf32>
      %93 = arith.addf %91, %92 : vector<8x128xf32>
      %cst_51 = arith.constant 1.000000e+00 : f32
      %94 = vector.broadcast %cst_51 : f32 to vector<8x128xf32>
      %95 = arith.addf %89, %94 : vector<8x128xf32>
      %96 = arith.divf %93, %95 : vector<8x128xf32>
      %cst_52 = arith.constant 1.000000e+00 : f32
      %97 = vector.broadcast %cst_52 : f32 to vector<8x128xf32>
      %98 = arith.subf %97, %96 : vector<8x128xf32>
      %cst_53 = arith.constant 1.000000e+00 : f32
      %99 = vector.broadcast %cst_53 : f32 to vector<8x128xf32>
      %100 = arith.mulf %99, %83 : vector<8x128xf32>
      %cst_54 = arith.constant 1.000000e+00 : f32
      %101 = vector.broadcast %cst_54 : f32 to vector<8x128xf32>
      %102 = arith.mulf %101, %75 : vector<8x128xf32>
      %103 = arith.addf %100, %102 : vector<8x128xf32>
      %cst_55 = arith.constant 1.000000e+00 : f32
      %104 = vector.broadcast %cst_55 : f32 to vector<8x128xf32>
      %105 = arith.mulf %104, %98 : vector<8x128xf32>
      %106 = arith.addf %103, %105 : vector<8x128xf32>
      %c0_56 = arith.constant 0 : index
      %c0_57 = arith.constant 0 : index
      %c0_58 = arith.constant 0 : index
      %107 = vector.load %arg7[%c0_56, %c0_57, %c0_58] : memref<1x8x128xf32, #tpu.memory_space<vmem>>, vector<1x8x128xf32>
      %108 = vector.shape_cast %107 : vector<1x8x128xf32> to vector<8x128xf32>
      %109 = vector.shape_cast %106 : vector<8x128xf32> to vector<1x8x128xf32>
      tpu.vector_store %arg7[%c0_56, %c0_57, %c0_58], %109 {strides = array<i32>} : memref<1x8x128xf32, #tpu.memory_space<vmem>>, vector<1x8x128xf32>,
    } else {
    }
    return
  }
  func.func @transform_0(%arg0: i32, %arg1: i32) -> (i32, i32, i32) {
    %c0_i32 = arith.constant 0 : i32
    %c0_i32_0 = arith.constant 0 : i32
    %c0_i32_1 = arith.constant 0 : i32
    return %arg0, %c0_i32, %c0_i32_0 : i32, i32, i32
  }
  func.func @transform_1(%arg0: i32, %arg1: i32) -> (i32, i32, i32) {
    %c0_i32 = arith.constant 0 : i32
    %c0_i32_0 = arith.constant 0 : i32
    return %arg0, %c0_i32, %arg1 : i32, i32, i32
  }
  func.func @transform_2(%arg0: i32, %arg1: i32) -> (i32, i32, i32) {
    %c0_i32 = arith.constant 0 : i32
    %c0_i32_0 = arith.constant 0 : i32
    %c0_i32_1 = arith.constant 0 : i32
    return %arg0, %c0_i32, %c0_i32_0 : i32, i32, i32
  }
  func.func @transform_3(%arg0: i32, %arg1: i32) -> (i32, i32, i32) {
    %c0_i32 = arith.constant 0 : i32
    %c0_i32_0 = arith.constant 0 : i32
    return %arg0, %c0_i32, %arg1 : i32, i32, i32
  }
  func.func @transform_4(%arg0: i32, %arg1: i32) -> (i32, i32, i32) {
    %c0_i32 = arith.constant 0 : i32
    %c0_i32_0 = arith.constant 0 : i32
    %c0_i32_1 = arith.constant 0 : i32
    return %arg0, %c0_i32, %c0_i32_0 : i32, i32, i32
  }
  func.func @transform_5(%arg0: i32, %arg1: i32) -> (i32, i32, i32) {
    %c0_i32 = arith.constant 0 : i32
    %c0_i32_0 = arith.constant 0 : i32
    %c0_i32_1 = arith.constant 0 : i32
    return %arg0, %c0_i32, %c0_i32_0 : i32, i32, i32
  }
}

</mosaic_0001>

<llo_original>
// kernel: tpu_custom_call.1
$region0: #{tpu_custom_call.1}
  #allocation0 [shape = 'u32[]', space=smem, size = 0x4, offset = 0x4, fixed_abs, tag = 'smem constant byte address 0x4 - core index']
  #allocation1 [shape = 'u32[144,128]{1,0:T(1,128)}', space=vmem, size = 0x12000, scoped, tag = 'internal scratch']
  #allocation2 [shape = 'f32[16,128]{1,0:T(8,128)}', space=vmem, size = 0x2000, scoped, tag = 'scratch operand']
  #allocation3 [shape = 'f32[8,1]{1,0:T(8,128)}', space=vmem, size = 0x1000, scoped, tag = 'scratch operand']
  #allocation4 [shape = 'f32[8,1]{1,0:T(8,128)}', space=vmem, size = 0x1000, scoped, tag = 'scratch operand']
  %s0 = inlined_call_operand.hbm [shape: f32[2,8,128], index: 0, kind: input, shape index: {}]
  %s1 = inlined_call_operand.hbm [shape: f32[2,8,256], index: 1, kind: input, shape index: {}]
  %s2 = inlined_call_operand.hbm [shape: bf16[2,128,128], index: 2, kind: input, shape index: {}]
  %s3 = inlined_call_operand.hbm [shape: bf16[2,128,256], index: 3, kind: input, shape index: {}]
  %s4 = inlined_call_operand.vmem [shape: f32[2,1,128], index: 4, kind: input, shape index: {}]
  %s5 = inlined_call_operand.hbm [shape: f32[2,8,128], index: 5, kind: output, shape index: {}]
  %s6 = sld [smem:[#allocation0]]
  $region77: #{tpu_custom_call.1} parent=0
    _
  %s8 = ssub.s32 1, %s6
  %s9 = scalar_select 0, %s8, %s6
  $region1: #{tpu_custom_call.1} parent=0
    #allocation5 [shape = 'u8[8192]{0}', space=vmem, size = 0x2000, scoped, tag = 'input window, operand 0']
    #allocation6 [shape = 's32[2]{0}', space=sflag, size = 0x8, scoped, tag = 'scoped memory for tpu_custom_call.1']
    #allocation7 [shape = 's32[2]{0}', space=sflag, size = 0x8, scoped, tag = 'scoped memory for tpu_custom_call.1']
    #allocation8 [shape = 'u8[16384]{0}', space=vmem, size = 0x4000, scoped, tag = 'input window, operand 1']
    #allocation9 [shape = 's32[2]{0}', space=sflag, size = 0x8, scoped, tag = 'scoped memory for tpu_custom_call.1']
    #allocation10 [shape = 'u8[65536]{0}', space=vmem, size = 0x10000, scoped, tag = 'input window, operand 2']
    #allocation11 [shape = 'u8[131072]{0}', space=vmem, size = 0x20000, scoped, tag = 'input window, operand 3']
    #allocation12 [shape = 's32[2]{0}', space=sflag, size = 0x8, scoped, tag = 'scoped memory for tpu_custom_call.1']
    #allocation13 [shape = 'u8[8192]{0}', space=vmem, size = 0x2000, scoped, tag = 'output window, operand 0']
    %10 = vsyncpa [#allocation6], 0
    %s11 = scalar_lea.sflag [#allocation6], 1
    %12 = vsyncpa %s11, 0
    %13 = vsyncpa [#allocation9], 0
    %s14 = scalar_lea.sflag [#allocation9], 1
    %15 = vsyncpa %s14, 0
    %16 = vsyncpa [#allocation12], 0
    %s17 = scalar_lea.sflag [#allocation12], 1
    %18 = vsyncpa %s17, 0
    %19 = vsyncpa [#allocation7], 0
    %s20 = scalar_lea.sflag [#allocation7], 1
    %21 = vsyncpa %s20, 0
    loop: start=0, step=1, limit=4
    $region2: #{tpu_custom_call.1} parent=1 // loop_pre_header
      _
    $region3: #{tpu_custom_call.1} parent=1 // loop_header
      %s23 = sphi 0, %s27
      %p24 = scmp.ge.s32.totalorder %s23, 4
      %s30 = sphi 0, %s42
      %s31 = sphi 0, %s38
      %s32 = sphi 0, %s30
      %s33 = sphi 0, %s31
      %s34 = sphi 0, %s32
      %s35 = sphi 0, %s33
      %s45 = sphi 0, %s47
      %s48 = sphi 0, %s45
      %s49 = sphi 0, %s48
      %s65 = sphi 0, %s49
      %s73 = sphi 0, %s75
      %s76 = sphi 0, %s73
      %s77 = sphi 0, %s76
      %s93 = sphi 0, %s77
      %s99 = sphi 0, %s101
      %s102 = sphi 0, %s99
      %s103 = sphi 0, %s102
      %s119 = sphi 0, %s103
      %s127 = sphi 0, %s129
      %s130 = sphi 0, %s127
      %s131 = sphi 0, %s130
      %s147 = sphi 0, %s131
      %s153 = sphi 0, %s155
      %s156 = sphi 0, %s153
      %s157 = sphi 0, %s156
      %s173 = sphi 0, %s157
      %s179 = sphi 0, %s181
      %s182 = sphi 0, %s179
      %s183 = sphi 0, %s182
      %s199 = sphi 0, %s183
    $region4: #{tpu_custom_call.1} parent=1 // loop_header_branch
      %26 = sbr.rel (%p24) target = $region8
    $region5: #{tpu_custom_call.1} parent=1 // loop_body
      %s28 = ssub.s32 %s23, 1
      %s29 = ssub.s32 %s23, 2
      %s36 = sadd.s32 1, %s31
      %p37 = scmp.ge.s32.totalorder %s36, 1
      %s38 = scalar_select %p37, 0, %s36
      %s39 = sadd.s32 1, %s30
      %s40 = scalar_select %p37, %s39, %s30
      %p41 = scmp.ge.s32.totalorder %s40, 2
      %s42 = scalar_select %p41, 0, %s40
      %s43 = ssub.s32 %s30, %s42
      %p44 = scmp.eq.s32.totalorder %s43, 0
      %s46 = sadd.s32 %s45, 1
      %s47 = scalar_select %p44, %s45, %s46
      %p50 = pneg %p44
      %p51 = scmp.eq.s32.totalorder %s23, 1
      %p52 = por %p50, %p51
      %p53 = scmp.ne.s32.totalorder %s45, %s48
      %p54 = scmp.eq.s32.totalorder %s23, 0
      %p55 = por %p53, %p54
      %p56 = scmp.ne.s32.totalorder %s45, %s48
      %p57 = scmp.eq.s32.totalorder %s28, 1
      %p58 = por %p56, %p57
      %p59 = scmp.ne.s32.totalorder %s48, %s49
      %p60 = scmp.eq.s32.totalorder %s28, 0
      %p61 = por %p59, %p60
      %p62 = scmp.ne.s32.totalorder %s48, %s49
      %p63 = scmp.eq.s32.totalorder %s29, 1
      %p64 = por %p62, %p63
      %p66 = scmp.ne.s32.totalorder %s49, %s65
      %p67 = scmp.eq.s32.totalorder %s29, 0
      %p68 = por %p66, %p67
      %s69 = ssub.s32 %s30, %s42
      %s70 = ssub.s32 %s31, %s38
      %s71 = sor.u32 %s69, %s70
      %p72 = scmp.eq.s32.totalorder %s71, 0
      %s74 = sadd.s32 %s73, 1
      %s75 = scalar_select %p72, %s73, %s74
      %p78 = pneg %p72
      %p79 = scmp.eq.s32.totalorder %s23, 1
      %p80 = por %p78, %p79
      %p81 = scmp.ne.s32.totalorder %s73, %s76
      %p82 = scmp.eq.s32.totalorder %s23, 0
      %p83 = por %p81, %p82
      %p84 = scmp.ne.s32.totalorder %s73, %s76
      %p85 = scmp.eq.s32.totalorder %s28, 1
      %p86 = por %p84, %p85
      %p87 = scmp.ne.s32.totalorder %s76, %s77
      %p88 = scmp.eq.s32.totalorder %s28, 0
      %p89 = por %p87, %p88
      %p90 = scmp.ne.s32.totalorder %s76, %s77
      %p91 = scmp.eq.s32.totalorder %s29, 1
      %p92 = por %p90, %p91
      %p94 = scmp.ne.s32.totalorder %s77, %s93
      %p95 = scmp.eq.s32.totalorder %s29, 0
      %p96 = por %p94, %p95
      %s97 = ssub.s32 %s30, %s42
      %p98 = scmp.eq.s32.totalorder %s97, 0
      %s100 = sadd.s32 %s99, 1
      %s101 = scalar_select %p98, %s99, %s100
      %p104 = pneg %p98
      %p105 = scmp.eq.s32.totalorder %s23, 1
      %p106 = por %p104, %p105
      %p107 = scmp.ne.s32.totalorder %s99, %s102
      %p108 = scmp.eq.s32.totalorder %s23, 0
      %p109 = por %p107, %p108
      %p110 = scmp.ne.s32.totalorder %s99, %s102
      %p111 = scmp.eq.s32.totalorder %s28, 1
      %p112 = por %p110, %p111
      %p113 = scmp.ne.s32.totalorder %s102, %s103
      %p114 = scmp.eq.s32.totalorder %s28, 0
      %p115 = por %p113, %p114
      %p116 = scmp.ne.s32.totalorder %s102, %s103
      %p117 = scmp.eq.s32.totalorder %s29, 1
      %p118 = por %p116, %p117
      %p120 = scmp.ne.s32.totalorder %s103, %s119
      %p121 = scmp.eq.s32.totalorder %s29, 0
      %p122 = por %p120, %p121
      %s123 = ssub.s32 %s30, %s42
      %s124 = ssub.s32 %s31, %s38
      %s125 = sor.u32 %s123, %s124
      %p126 = scmp.eq.s32.totalorder %s125, 0
      %s128 = sadd.s32 %s127, 1
      %s129 = scalar_select %p126, %s127, %s128
      %p132 = pneg %p126
      %p133 = scmp.eq.s32.totalorder %s23, 1
      %p134 = por %p132, %p133
      %p135 = scmp.ne.s32.totalorder %s127, %s130
      %p136 = scmp.eq.s32.totalorder %s23, 0
      %p137 = por %p135, %p136
      %p138 = scmp.ne.s32.totalorder %s127, %s130
      %p139 = scmp.eq.s32.totalorder %s28, 1
      %p140 = por %p138, %p139
      %p141 = scmp.ne.s32.totalorder %s130, %s131
      %p142 = scmp.eq.s32.totalorder %s28, 0
      %p143 = por %p141, %p142
      %p144 = scmp.ne.s32.totalorder %s130, %s131
      %p145 = scmp.eq.s32.totalorder %s29, 1
      %p146 = por %p144, %p145
      %p148 = scmp.ne.s32.totalorder %s131, %s147
      %p149 = scmp.eq.s32.totalorder %s29, 0
      %p150 = por %p148, %p149
      %s151 = ssub.s32 %s30, %s42
      %p152 = scmp.eq.s32.totalorder %s151, 0
      %s154 = sadd.s32 %s153, 1
      %s155 = scalar_select %p152, %s153, %s154
      %p158 = pneg %p152
      %p159 = scmp.eq.s32.totalorder %s23, 1
      %p160 = por %p158, %p159
      %p161 = scmp.ne.s32.totalorder %s153, %s156
      %p162 = scmp.eq.s32.totalorder %s23, 0
      %p163 = por %p161, %p162
      %p164 = scmp.ne.s32.totalorder %s153, %s156
      %p165 = scmp.eq.s32.totalorder %s28, 1
      %p166 = por %p164, %p165
      %p167 = scmp.ne.s32.totalorder %s156, %s157
      %p168 = scmp.eq.s32.totalorder %s28, 0
      %p169 = por %p167, %p168
      %p170 = scmp.ne.s32.totalorder %s156, %s157
      %p171 = scmp.eq.s32.totalorder %s29, 1
      %p172 = por %p170, %p171
      %p174 = scmp.ne.s32.totalorder %s157, %s173
      %p175 = scmp.eq.s32.totalorder %s29, 0
      %p176 = por %p174, %p175
      %s177 = ssub.s32 %s30, %s42
      %p178 = scmp.eq.s32.totalorder %s177, 0
      %s180 = sadd.s32 %s179, 1
      %s181 = scalar_select %p178, %s179, %s180
      %p184 = pneg %p178
      %p185 = scmp.eq.s32.totalorder %s23, 1
      %p186 = por %p184, %p185
      %p187 = scmp.ne.s32.totalorder %s179, %s182
      %p188 = scmp.eq.s32.totalorder %s23, 0
      %p189 = por %p187, %p188
      %p190 = scmp.ne.s32.totalorder %s179, %s182
      %p191 = scmp.eq.s32.totalorder %s28, 1
      %p192 = por %p190, %p191
      %p193 = scmp.ne.s32.totalorder %s182, %s183
      %p194 = scmp.eq.s32.totalorder %s28, 0
      %p195 = por %p193, %p194
      %p196 = scmp.ne.s32.totalorder %s182, %s183
      %p197 = scmp.eq.s32.totalorder %s29, 1
      %p198 = por %p196, %p197
      %p200 = scmp.ne.s32.totalorder %s183, %s199
      %p201 = scmp.eq.s32.totalorder %s29, 0
      %p202 = por %p200, %p201
      %p203 = scmp.le.s32.totalorder 1, %s23
      %p204 = scmp.lt.s32.totalorder %s23, 3
      %p205 = pnand %p203, %p204
      %p206 = pneg %p205
      // Predicated region
      $region9: #{tpu_custom_call.1} parent=5 // pred_check
        _
      $region10: #{tpu_custom_call.1} parent=5 // pred_check_branch
        %208 = sbr.rel (%p205) target = $region12
      $region11: #{tpu_custom_call.1} parent=5 // pred_region
        %s209 = ssub.s32 %s23, 1
      $region12: #{tpu_custom_call.1} parent=5 // pred_fallthru
        _
      %p210 = scmp.lt.s32.totalorder %s23, 2
      // Predicated region
      $region13: #{tpu_custom_call.1} parent=5 // pred_check
        %p211 = pneg %p210
      $region14: #{tpu_custom_call.1} parent=5 // pred_check_branch
        %213 = sbr.rel (%p211) target = $region16
      $region15: #{tpu_custom_call.1} parent=5 // pred_region
        // Predicated region
        $region17: #{tpu_custom_call.1} parent=15 // pred_check
          %p214 = pneg %p55
        $region18: #{tpu_custom_call.1} parent=15 // pred_check_branch
          %216 = sbr.rel (%p214) target = $region20
        $region19: #{tpu_custom_call.1} parent=15 // pred_region
          %s217 = sand.u32 %s45, 1
          %s218 = scalar_lea.sflag [#allocation6], %s217
          %s219 = sand.u32 %s45, 1
          %s220 = smul.addr %s219, 8
          %s221 = scalar_lea.vmem [#allocation5], %s220
          %s223 = ssub.s32 128, 128
          %224 = vsyncadd %s218, %s223
          %s225 = smul.addr %s30, 128
          %s226 = scalar_lea.hbm %s0, %s225
          %s228 = sshll.u32 %s221, 4
          %s229 = int_to_ptr.vmem [resolvable:$true] %s228
          %231 = dma.hbm_to_vmem [thread:$0]  %s226, 128, %s229, %s218
        $region20: #{tpu_custom_call.1} parent=15 // pred_fallthru
          _
        // Predicated region
        $region21: #{tpu_custom_call.1} parent=15 // pred_check
          %p232 = pneg %p83
        $region22: #{tpu_custom_call.1} parent=15 // pred_check_branch
          %234 = sbr.rel (%p232) target = $region24
        $region23: #{tpu_custom_call.1} parent=15 // pred_region
          %s235 = sand.u32 %s23, 1
          %s236 = scalar_lea.sflag [#allocation9], %s235
          %s237 = sand.u32 %s73, 1
          %s238 = smul.addr %s237, 16
          %s239 = scalar_lea.vmem [#allocation8], %s238
          %s240 = smul.u32 2, %s31
          %s242 = ssub.s32 256, 256
          %243 = vsyncadd %s236, %s242
          %s244 = smul.addr %s30, 2
          %s245 = sadd.s32 %s240, %s244
          %s246 = smul.addr %s245, 128
          %s247 = scalar_lea.hbm %s1, %s246
          %s249 = sshll.u32 %s239, 4
          %s250 = int_to_ptr.vmem [resolvable:$true] %s249
          %252 = dma.hbm_to_vmem [thread:$0]  %s247, 256, %s250, %s236
        $region24: #{tpu_custom_call.1} parent=15 // pred_fallthru
          _
        // Predicated region
        $region25: #{tpu_custom_call.1} parent=15 // pred_check
          %p253 = pneg %p109
        $region26: #{tpu_custom_call.1} parent=15 // pred_check_branch
          %255 = sbr.rel (%p253) target = $region28
        $region27: #{tpu_custom_call.1} parent=15 // pred_region
          %s256 = sand.u32 %s23, 1
          %s257 = scalar_lea.sflag [#allocation9], %s256
          %s258 = sand.u32 %s99, 1
          %s259 = smul.addr %s258, 64
          %s260 = scalar_lea.vmem [#allocation10], %s259
          %s262 = ssub.s32 1024, 1024
          %263 = vsyncadd %s257, %s262
          %s264 = smul.addr %s30, 16
          %s265 = smul.addr %s264, 64
          %s266 = scalar_lea.hbm %s2, %s265
          %s267 = sshll.u32 %s260, 4
          %s268 = int_to_ptr.vmem [resolvable:$true] %s267
          %273 = dma.hbm_to_vmem [thread:$0]  %s266, 1024, %s268, %s257, 64, 64, 4
        $region28: #{tpu_custom_call.1} parent=15 // pred_fallthru
          _
        // Predicated region
        $region29: #{tpu_custom_call.1} parent=15 // pred_check
          %p274 = pneg %p137
        $region30: #{tpu_custom_call.1} parent=15 // pred_check_branch
          %276 = sbr.rel (%p274) target = $region32
        $region31: #{tpu_custom_call.1} parent=15 // pred_region
          %s277 = sand.u32 %s127, 1
          %s278 = scalar_lea.sflag [#allocation12], %s277
          %s279 = sand.u32 %s127, 1
          %s280 = smul.addr %s279, 128
          %s281 = scalar_lea.vmem [#allocation11], %s280
          %s282 = smul.u32 2, %s31
          %s284 = ssub.s32 2048, 2048
          %285 = vsyncadd %s278, %s284
          %s286 = smul.addr %s30, 32
          %s287 = sadd.s32 %s282, %s286
          %s288 = smul.addr %s287, 64
          %s289 = scalar_lea.hbm %s3, %s288
          %s290 = sshll.u32 %s281, 4
          %s291 = int_to_ptr.vmem [resolvable:$true] %s290
          %296 = dma.hbm_to_vmem [thread:$0]  %s289, 2048, %s291, %s278, 128, 128, 8
        $region32: #{tpu_custom_call.1} parent=15 // pred_fallthru
          _
        // Predicated region
        $region33: #{tpu_custom_call.1} parent=15 // pred_check
          %p297 = pneg %p163
        $region34: #{tpu_custom_call.1} parent=15 // pred_check_branch
          %299 = sbr.rel (%p297) target = $region36
        $region35: #{tpu_custom_call.1} parent=15 // pred_region
          %p300 = scmp.lt.s32.totalorder %s30, 1
          %s301 = scalar_select %p300, %s30, 1
          %s302 = scalar_lea.vmem %s4, %s301
        $region36: #{tpu_custom_call.1} parent=15 // pred_fallthru
          _
      $region16: #{tpu_custom_call.1} parent=5 // pred_fallthru
        _
      %p303 = scmp.le.s32.totalorder 1, %s23
      %p304 = scmp.lt.s32.totalorder %s23, 3
      %p305 = pnand %p303, %p304
      %p306 = pneg %p305
      // Predicated region
      $region37: #{tpu_custom_call.1} parent=5 // pred_check
        _
      $region38: #{tpu_custom_call.1} parent=5 // pred_check_branch
        %308 = sbr.rel (%p305) target = $region40
      $region39: #{tpu_custom_call.1} parent=5 // pred_region
        %s309 = ssub.s32 %s23, 1
        %s310 = sand.u32 %s48, 1
        %s311 = scalar_lea.sflag [#allocation6], %s310
        %s312 = sand.u32 %s48, 1
        %s313 = smul.addr %s312, 8
        %s314 = scalar_lea.vmem [#allocation5], %s313
        // Predicated region
        $region41: #{tpu_custom_call.1} parent=39 // pred_check
          %p315 = pneg %p61
        $region42: #{tpu_custom_call.1} parent=39 // pred_check_branch
          %317 = sbr.rel (%p315) target = $region44
        $region43: #{tpu_custom_call.1} parent=39 // pred_region
          %318 = dma.done %s311, 128
        $region44: #{tpu_custom_call.1} parent=39 // pred_fallthru
          _
        %s319 = sand.u32 %s28, 1
        %s320 = scalar_lea.sflag [#allocation9], %s319
        %s321 = sand.u32 %s76, 1
        %s322 = smul.addr %s321, 16
        %s323 = scalar_lea.vmem [#allocation8], %s322
        // Predicated region
        $region45: #{tpu_custom_call.1} parent=39 // pred_check
          %p324 = pneg %p89
        $region46: #{tpu_custom_call.1} parent=39 // pred_check_branch
          %326 = sbr.rel (%p324) target = $region48
        $region47: #{tpu_custom_call.1} parent=39 // pred_region
          %327 = dma.done %s320, 256
        $region48: #{tpu_custom_call.1} parent=39 // pred_fallthru
          _
        %s328 = sand.u32 %s28, 1
        %s329 = scalar_lea.sflag [#allocation9], %s328
        %s330 = sand.u32 %s102, 1
        %s331 = smul.addr %s330, 64
        %s332 = scalar_lea.vmem [#allocation10], %s331
        // Predicated region
        $region49: #{tpu_custom_call.1} parent=39 // pred_check
          %p333 = pneg %p115
        $region50: #{tpu_custom_call.1} parent=39 // pred_check_branch
          %335 = sbr.rel (%p333) target = $region52
        $region51: #{tpu_custom_call.1} parent=39 // pred_region
          %336 = dma.done %s329, 1024
        $region52: #{tpu_custom_call.1} parent=39 // pred_fallthru
          _
        %s337 = sand.u32 %s130, 1
        %s338 = scalar_lea.sflag [#allocation12], %s337
        %s339 = sand.u32 %s130, 1
        %s340 = smul.addr %s339, 128
        %s341 = scalar_lea.vmem [#allocation11], %s340
        // Predicated region
        $region53: #{tpu_custom_call.1} parent=39 // pred_check
          %p342 = pneg %p143
        $region54: #{tpu_custom_call.1} parent=39 // pred_check_branch
          %344 = sbr.rel (%p342) target = $region56
        $region55: #{tpu_custom_call.1} parent=39 // pred_region
          %345 = dma.done %s338, 2048
        $region56: #{tpu_custom_call.1} parent=39 // pred_fallthru
          _
        %s346 = sand.u32 %s48, 1
        %s347 = scalar_lea.sflag [#allocation6], %s346
        %s348 = sand.u32 %s48, 1
        %s349 = smul.addr %s348, 8
        %s350 = scalar_lea.vmem [#allocation5], %s349
        %p351 = pneg %p61
        %p352 = pneg %p58
        %s353 = sand.u32 %s28, 1
        %s354 = scalar_lea.sflag [#allocation9], %s353
        %s355 = sand.u32 %s76, 1
        %s356 = smul.addr %s355, 16
        %s357 = scalar_lea.vmem [#allocation8], %s356
        %p358 = pneg %p89
        %p359 = pneg %p86
        %s360 = sand.u32 %s28, 1
        %s361 = scalar_lea.sflag [#allocation9], %s360
        %s362 = sand.u32 %s102, 1
        %s363 = smul.addr %s362, 64
        %s364 = scalar_lea.vmem [#allocation10], %s363
        %p365 = pneg %p115
        %p366 = pneg %p112
        %s367 = sand.u32 %s130, 1
        %s368 = scalar_lea.sflag [#allocation12], %s367
        %s369 = sand.u32 %s130, 1
        %s370 = smul.addr %s369, 128
        %s371 = scalar_lea.vmem [#allocation11], %s370
        %p372 = pneg %p143
        %p373 = pneg %p140
        %p374 = scmp.lt.s32.totalorder %s32, 1
        %s375 = scalar_select %p374, %s32, 1
        %s376 = scalar_lea.vmem %s4, %s375
        %p377 = pneg %p169
        %p378 = pneg %p166
        %p379 = pneg %p195
        %p380 = pneg %p192
        %s381 = sand.u32 %s182, 1
        %s382 = scalar_lea.sflag [#allocation7], %s381
        %s383 = sand.u32 %s182, 1
        %s384 = smul.addr %s383, 8
        %s385 = scalar_lea.vmem [#allocation13], %s384
        %s386 = smul.u32 2, %s33
        %s387 = smul.u32 2, %s33
        %p388 = scmp.lt.s32.totalorder %s32, 1
        %s389 = scalar_select %p388, %s32, 1
        %s390 = scalar_lea.vmem %s4, %s389
        %p391 = scmp.eq.s32.totalorder %s33, 0
        // Predicated region
        $region57: #{tpu_custom_call.1} parent=39 // pred_check
          %p392 = pneg %p391
        $region58: #{tpu_custom_call.1} parent=39 // pred_check_branch
          %394 = sbr.rel (%p392) target = $region60
        $region59: #{tpu_custom_call.1} parent=39 // pred_region
          %395 = vst [vmem:[#allocation2] sm:$0xff] 0.0
          %396 = vst [vmem:[#allocation2 + $0x8] sm:$0xff] 0.0
          %vm397 = vcmask 7168
          %398 = vst.msk [vmem:[#allocation3] sm:$0xff] %vm397, 0.0
          %399 = vst.msk [vmem:[#allocation4] sm:$0xff] %vm397, 0.0
        $region60: #{tpu_custom_call.1} parent=39 // pred_fallthru
          _
        %v400 = vld [vmem:[%s323] sm:$0xff]
        %v401 = vld [vmem:[%s323 + $0x8] sm:$0xff]
        %v402 = vld [vmem:[%s341] sm:$0xff]
        %v403 = vld [vmem:[%s341 + $0x8] sm:$0xff]
        %v404 = vld [vmem:[%s341 + $0x10] sm:$0xff]
        %v405 = vld [vmem:[%s341 + $0x18] sm:$0xff]
        %v406 = vld [vmem:[%s341 + $0x20] sm:$0xff]
        %v407 = vld [vmem:[%s341 + $0x28] sm:$0xff]
        %v408 = vld [vmem:[%s341 + $0x30] sm:$0xff]
        %v409 = vld [vmem:[%s341 + $0x38] sm:$0xff]
        %v410 = vld [vmem:[%s341 + $0x40] sm:$0xff]
        %v411 = vld [vmem:[%s341 + $0x48] sm:$0xff]
        %v412 = vld [vmem:[%s341 + $0x50] sm:$0xff]
        %v413 = vld [vmem:[%s341 + $0x58] sm:$0xff]
        %v414 = vld [vmem:[%s341 + $0x60] sm:$0xff]
        %v415 = vld [vmem:[%s341 + $0x68] sm:$0xff]
        %v416 = vld [vmem:[%s341 + $0x70] sm:$0xff]
        %v417 = vld [vmem:[%s341 + $0x78] sm:$0xff]
        %v418 = vunpack.c.l.bf16 %v402
        %v419 = vunpack.c.h.bf16 %v402
        %v420 = vunpack.c.l.bf16 %v403
        %v421 = vunpack.c.h.bf16 %v403
        %v422 = vunpack.c.l.bf16 %v404
        %v423 = vunpack.c.h.bf16 %v404
        %v424 = vunpack.c.l.bf16 %v405
        %v425 = vunpack.c.h.bf16 %v405
        %v426 = vunpack.c.l.bf16 %v406
        %v427 = vunpack.c.h.bf16 %v406
        %v428 = vunpack.c.l.bf16 %v407
        %v429 = vunpack.c.h.bf16 %v407
        %v430 = vunpack.c.l.bf16 %v408
        %v431 = vunpack.c.h.bf16 %v408
        %v432 = vunpack.c.l.bf16 %v409
        %v433 = vunpack.c.h.bf16 %v409
        %v434 = vunpack.c.l.bf16 %v410
        %v435 = vunpack.c.h.bf16 %v410
        %v436 = vunpack.c.l.bf16 %v411
        %v437 = vunpack.c.h.bf16 %v411
        %v438 = vunpack.c.l.bf16 %v412
        %v439 = vunpack.c.h.bf16 %v412
        %v440 = vunpack.c.l.bf16 %v413
        %v441 = vunpack.c.h.bf16 %v413
        %v442 = vunpack.c.l.bf16 %v414
        %v443 = vunpack.c.h.bf16 %v414
        %v444 = vunpack.c.l.bf16 %v415
        %v445 = vunpack.c.h.bf16 %v415
        %v446 = vunpack.c.l.bf16 %v416
        %v447 = vunpack.c.h.bf16 %v416
        %v448 = vunpack.c.l.bf16 %v417
        %v449 = vunpack.c.h.bf16 %v417
        %v450 = vxor.u32 %v400, 2147483648
        %v451 = vxor.u32 %v401, 2147483648
        %v452 = vmul.f32 %v450, 1.442695
        %v453 = vpow.pop %v452
        %v454 = vmul.f32 %v451, 1.442695
        %v455 = vpow.pop %v454
        %v456 = vadd.f32 %v453, 1.0
        %v457 = vadd.f32 %v455, 1.0
        %v458 = vrcp.pop %v456
        %v459 = vmul.f32 1.0, %v458
        %v460 = vrcp.pop %v457
        %v461 = vmul.f32 1.0, %v460
        %v462 = vsub.f32 0.0, %v400
        %v463 = vsub.f32 0.0, %v401
        %v464 = vmax.f32 %v462, 0.0
        %v465 = vmax.f32 %v463, 0.0
        %vm466 = vcmp.ne.f32.partialorder %v462, %v462
        %vm467 = vcmp.ne.f32.partialorder %v463, %v463
        %v468 = vadd.f32 %v462, 0.0
        %v469 = vadd.f32 %v463, 0.0
        %v470 = vand.u32 2147483647, %v462
        %v471 = vand.u32 2147483647, %v463
        %v472 = vsub.f32 0.0, %v470
        %v473 = vsub.f32 0.0, %v471
        %v474 = vmul.f32 %v472, 1.442695
        %v475 = vpow.pop %v474
        %v476 = vmul.f32 %v473, 1.442695
        %v477 = vpow.pop %v476
        %v478 = vadd.f32 %v475, 1.0
        %v479 = vlog2.pop %v478
        %v480 = vmul.f32 %v479, 0.6931472
        %v481 = vmul.f32 -0.5, %v475
        %v482 = vadd.f32 %v481, 1.0
        %v483 = vmul.f32 %v482, %v475
        %v484 = vand.u32 2147483647, %v475
        %vm485 = vcmp.lt.f32.partialorder %v484, 0.0004427343
        %v486 = vsel %vm485, %v483, %v480
        %v487 = vadd.f32 %v477, 1.0
        %v488 = vlog2.pop %v487
        %v489 = vmul.f32 %v488, 0.6931472
        %v490 = vmul.f32 -0.5, %v477
        %v491 = vadd.f32 %v490, 1.0
        %v492 = vmul.f32 %v491, %v477
        %v493 = vand.u32 2147483647, %v477
        %vm494 = vcmp.lt.f32.partialorder %v493, 0.0004427343
        %v495 = vsel %vm494, %v492, %v489
        %v496 = vadd.f32 %v464, %v486
        %v497 = vadd.f32 %v465, %v495
        %v498 = vsel %vm466, %v468, %v496
        %v499 = vsel %vm467, %v469, %v497
        %v500 = vadd.f32 %v498, %v400
        %v501 = vadd.f32 %v499, %v401
        %v502 = vsub.f32 1.0, %v459
        %v503 = vsub.f32 1.0, %v461
        %v504 = vmul.f32 %v502, %v502
        %v505 = vmul.f32 %v503, %v503
        %v506 = vmul.f32 %v504, %v498
        %v507 = vmul.f32 %v505, %v499
        %v508 = vmul.f32 %v459, %v459
        %v509 = vmul.f32 %v461, %v461
        %v510 = vmul.f32 %v508, %v500
        %v511 = vmul.f32 %v509, %v501
        %v512 = vmul.f32 %v506, 0.25
        %v513 = vmul.f32 %v507, 0.25
        %v514 = vmul.f32 %v510, 0.75
        %v515 = vmul.f32 %v511, 0.75
        %v516 = vsub.f32 %v512, %v514
        %v517 = vsub.f32 %v513, %v515
        %v518 = vld [vmem:[#allocation2] sm:$0xff]
        %v519 = vld [vmem:[#allocation2 + $0x8] sm:$0xff]
        %520 = vmatprep.subr.mxu0 %v449
        %521 = vmatpush1.xpose.msra.mxu0 %v448
        %522 = vmatprep.subr.mxu0 %v447
        %523 = vmatpush1.xpose.msra.mxu0 %v446
        %524 = vmatprep.subr.mxu0 %v445
        %525 = vmatpush1.xpose.msra.mxu0 %v444
        %526 = vmatprep.subr.mxu0 %v443
        %527 = vmatpush1.xpose.msra.mxu0 %v442
        %528 = vmatprep.subr.mxu0 %v441
        %529 = vmatpush1.xpose.msra.mxu0 %v440
        %530 = vmatprep.subr.mxu0 %v439
        %531 = vmatpush1.xpose.msra.mxu0 %v438
        %532 = vmatprep.subr.mxu0 %v437
        %533 = vmatpush1.xpose.msra.mxu0 %v436
        %534 = vmatprep.subr.mxu0 %v435
        %535 = vmatpush1.xpose.msra.mxu0 %v434
        %536 = vmatprep.subr.mxu0 %v433
        %537 = vmatpush1.xpose.msra.mxu0 %v432
        %538 = vmatprep.subr.mxu0 %v431
        %539 = vmatpush1.xpose.msra.mxu0 %v430
        %540 = vmatprep.subr.mxu0 %v429
        %541 = vmatpush1.xpose.msra.mxu0 %v428
        %542 = vmatprep.subr.mxu0 %v427
        %543 = vmatpush1.xpose.msra.mxu0 %v426
        %544 = vmatprep.subr.mxu0 %v425
        %545 = vmatpush1.xpose.msra.mxu0 %v424
        %546 = vmatprep.subr.mxu0 %v423
        %547 = vmatpush1.xpose.msra.mxu0 %v422
        %548 = vmatprep.subr.mxu0 %v421
        %549 = vmatpush1.xpose.msra.mxu0 %v420
        %550 = vmatprep.subr.mxu0 %v419
        %551 = vmatpush1.xpose.msra.mxu0 %v418
        %552 = vmatprep.subr.mxu0 0.0
        %553 = vmatpush2.xpose.msra.mxu0 0.0
        %554 = vmatprep.subr.mxu0 0.0
        %555 = vmatpush2.xpose.msra.mxu0 0.0
        %556 = vmatprep.subr.mxu0 0.0
        %557 = vmatpush2.xpose.msra.mxu0 0.0
        %558 = vmatprep.subr.mxu0 0.0
        %559 = vmatpush2.xpose.msra.mxu0 0.0
        %560 = vmatprep.subr.mxu0 0.0
        %561 = vmatpush2.xpose.msra.mxu0 0.0
        %562 = vmatprep.subr.mxu0 0.0
        %563 = vmatpush2.xpose.msra.mxu0 0.0
        %564 = vmatprep.subr.mxu0 0.0
        %565 = vmatpush2.xpose.msra.mxu0 0.0
        %566 = vmatprep.subr.mxu0 0.0
        %567 = vmatpush2.xpose.msra.mxu0 0.0
        %568 = vmatprep.subr.mxu0 0.0
        %569 = vmatpush2.xpose.msra.mxu0 0.0
        %570 = vmatprep.subr.mxu0 0.0
        %571 = vmatpush2.xpose.msra.mxu0 0.0
        %572 = vmatprep.subr.mxu0 0.0
        %573 = vmatpush2.xpose.msra.mxu0 0.0
        %574 = vmatprep.subr.mxu0 0.0
        %575 = vmatpush2.xpose.msra.mxu0 0.0
        %576 = vmatprep.subr.mxu0 0.0
        %577 = vmatpush2.xpose.msra.mxu0 0.0
        %578 = vmatprep.subr.mxu0 0.0
        %579 = vmatpush2.xpose.msra.mxu0 0.0
        %580 = vmatprep.subr.mxu0 0.0
        %581 = vmatpush2.xpose.msra.mxu0 0.0
        %582 = vmatprep.subr.mxu0 0.0
        %583 = vmatpush2.xpose.msra.mxu0 0.0
        %584 = vmatprep.mubr.f32.mxu0 %v517
        %585 = vmatmul.mubr.f32.gmra.mxu0 %v516
        %v586 = vpop.f32.mrf.mxu0
        %v587 = vadd.f32 0.0, %v586
        %v588 = vpop.f32.mrf.mxu0
        %589 = vmatprep.mubr.f32.mxu0 %v461
        %590 = vmatmul.mubr.f32.gmra.mxu0 %v459
        %v591 = vpop.f32.mrf.mxu0
        %v592 = vadd.f32 0.0, %v591
        %v593 = vpop.f32.mrf.mxu0
        %594 = vdwg.mxu0
        %v595 = vadd.f32 %v518, %v587
        %v596 = vadd.f32 %v519, %v592
        %597 = vst [vmem:[#allocation2] sm:$0xff] %v595
        %598 = vst [vmem:[#allocation2 + $0x8] sm:$0xff] %v596
        %v599 = vld [vmem:[#allocation3] sm:$0xff]
        %v600 = vadd.f32 %v514, %v515
        %601 = vadd.xlane.f32.xlu0 %v600
        %v602 = vpop.xlane.xlu0 %601
        %v603 = vadd.f32 %v599, %v602
        %vm604 = vcmask 7168
        %605 = vst.msk [vmem:[#allocation3] sm:$0xff] %vm604, %v603
        %v606 = vld [vmem:[#allocation4] sm:$0xff]
        %v607 = vadd.f32 %v459, %v461
        %608 = vadd.xlane.f32.xlu0 %v607
        %v609 = vpop.xlane.xlu0 %608
        %v610 = vadd.f32 %v606, %v609
        %611 = vst.msk [vmem:[#allocation4] sm:$0xff] %vm604, %v610
        // Predicated region
        $region61: #{tpu_custom_call.1} parent=39 // pred_check
          %p612 = pneg %p391
        $region62: #{tpu_custom_call.1} parent=39 // pred_check_branch
          %614 = sbr.rel (%p612) target = $region64
        $region63: #{tpu_custom_call.1} parent=39 // pred_region
          %v615 = vld [vmem:[%s314] sm:$0xff]
          %v616 = vld [vmem:[%s332] sm:$0xf]
          %v617 = vld [vmem:[%s332 + $0x4] sm:$0xf]
          %v618 = vld [vmem:[%s332 + $0x8] sm:$0xf]
          %v619 = vld [vmem:[%s332 + $0xc] sm:$0xf]
          %v620 = vld [vmem:[%s332 + $0x10] sm:$0xf]
          %v621 = vld [vmem:[%s332 + $0x14] sm:$0xf]
          %v622 = vld [vmem:[%s332 + $0x18] sm:$0xf]
          %v623 = vld [vmem:[%s332 + $0x1c] sm:$0xf]
          %v624 = vld [vmem:[%s332 + $0x20] sm:$0xf]
          %v625 = vld [vmem:[%s332 + $0x24] sm:$0xf]
          %v626 = vld [vmem:[%s332 + $0x28] sm:$0xf]
          %v627 = vld [vmem:[%s332 + $0x2c] sm:$0xf]
          %v628 = vld [vmem:[%s332 + $0x30] sm:$0xf]
          %v629 = vld [vmem:[%s332 + $0x34] sm:$0xf]
          %v630 = vld [vmem:[%s332 + $0x38] sm:$0xf]
          %v631 = vld [vmem:[%s332 + $0x3c] sm:$0xf]
          %v632 = vunpack.c.l.bf16 %v616
          %v633 = vunpack.c.l.bf16 %v617
          %v634 = vunpack.c.l.bf16 %v618
          %v635 = vunpack.c.l.bf16 %v619
          %v636 = vunpack.c.l.bf16 %v620
          %v637 = vunpack.c.l.bf16 %v621
          %v638 = vunpack.c.l.bf16 %v622
          %v639 = vunpack.c.l.bf16 %v623
          %v640 = vunpack.c.l.bf16 %v624
          %v641 = vunpack.c.l.bf16 %v625
          %v642 = vunpack.c.l.bf16 %v626
          %v643 = vunpack.c.l.bf16 %v627
          %v644 = vunpack.c.l.bf16 %v628
          %v645 = vunpack.c.l.bf16 %v629
          %v646 = vunpack.c.l.bf16 %v630
          %v647 = vunpack.c.l.bf16 %v631
          %648 = vmax.xlane.f32.xlu0 %v615
          %v649 = vpop.xlane.xlu0 %648
          %v650 = vsub.f32 %v615, %v649
          %v651 = vmul.f32 %v650, 1.442695
          %v652 = vpow.pop %v651
          %653 = vadd.xlane.f32.xlu0 %v652
          %v654 = vpop.xlane.xlu0 %653
          %v655 = vrcp.pop %v654
          %v656 = vmul.f32 %v652, %v655
          %657 = vmatprep.subr.mxu0 0.0
          %658 = vmatpush1.xpose.msra.mxu0 %v647
          %659 = vmatprep.subr.mxu0 0.0
          %660 = vmatpush1.xpose.msra.mxu0 %v646
          %661 = vmatprep.subr.mxu0 0.0
          %662 = vmatpush1.xpose.msra.mxu0 %v645
          %663 = vmatprep.subr.mxu0 0.0
          %664 = vmatpush1.xpose.msra.mxu0 %v644
          %665 = vmatprep.subr.mxu0 0.0
          %666 = vmatpush1.xpose.msra.mxu0 %v643
          %667 = vmatprep.subr.mxu0 0.0
          %668 = vmatpush1.xpose.msra.mxu0 %v642
          %669 = vmatprep.subr.mxu0 0.0
          %670 = vmatpush1.xpose.msra.mxu0 %v641
          %671 = vmatprep.subr.mxu0 0.0
          %672 = vmatpush1.xpose.msra.mxu0 %v640
          %673 = vmatprep.subr.mxu0 0.0
          %674 = vmatpush1.xpose.msra.mxu0 %v639
          %675 = vmatprep.subr.mxu0 0.0
          %676 = vmatpush1.xpose.msra.mxu0 %v638
          %677 = vmatprep.subr.mxu0 0.0
          %678 = vmatpush1.xpose.msra.mxu0 %v637
          %679 = vmatprep.subr.mxu0 0.0
          %680 = vmatpush1.xpose.msra.mxu0 %v636
          %681 = vmatprep.subr.mxu0 0.0
          %682 = vmatpush1.xpose.msra.mxu0 %v635
          %683 = vmatprep.subr.mxu0 0.0
          %684 = vmatpush1.xpose.msra.mxu0 %v634
          %685 = vmatprep.subr.mxu0 0.0
          %686 = vmatpush1.xpose.msra.mxu0 %v633
          %687 = vmatprep.subr.mxu0 0.0
          %688 = vmatpush1.xpose.msra.mxu0 %v632
          %689 = vmatprep.subr.mxu0 0.0
          %690 = vmatpush2.xpose.msra.mxu0 0.0
          %691 = vmatprep.subr.mxu0 0.0
          %692 = vmatpush2.xpose.msra.mxu0 0.0
          %693 = vmatprep.subr.mxu0 0.0
          %694 = vmatpush2.xpose.msra.mxu0 0.0
          %695 = vmatprep.subr.mxu0 0.0
          %696 = vmatpush2.xpose.msra.mxu0 0.0
          %697 = vmatprep.subr.mxu0 0.0
          %698 = vmatpush2.xpose.msra.mxu0 0.0
          %699 = vmatprep.subr.mxu0 0.0
          %700 = vmatpush2.xpose.msra.mxu0 0.0
          %701 = vmatprep.subr.mxu0 0.0
          %702 = vmatpush2.xpose.msra.mxu0 0.0
          %703 = vmatprep.subr.mxu0 0.0
          %704 = vmatpush2.xpose.msra.mxu0 0.0
          %705 = vmatprep.subr.mxu0 0.0
          %706 = vmatpush2.xpose.msra.mxu0 0.0
          %707 = vmatprep.subr.mxu0 0.0
          %708 = vmatpush2.xpose.msra.mxu0 0.0
          %709 = vmatprep.subr.mxu0 0.0
          %710 = vmatpush2.xpose.msra.mxu0 0.0
          %711 = vmatprep.subr.mxu0 0.0
          %712 = vmatpush2.xpose.msra.mxu0 0.0
          %713 = vmatprep.subr.mxu0 0.0
          %714 = vmatpush2.xpose.msra.mxu0 0.0
          %715 = vmatprep.subr.mxu0 0.0
          %716 = vmatpush2.xpose.msra.mxu0 0.0
          %717 = vmatprep.subr.mxu0 0.0
          %718 = vmatpush2.xpose.msra.mxu0 0.0
          %719 = vmatprep.subr.mxu0 0.0
          %720 = vmatpush2.xpose.msra.mxu0 0.0
          %721 = vmatprep.mubr.f32.mxu0 0.0
          %722 = vmatmul.mubr.f32.gmra.mxu0 %v656
          %v723 = vpop.f32.mrf.mxu0
          %v724 = vadd.f32 0.0, %v723
          %v725 = vpop.f32.mrf.mxu0
          %726 = vdwg.mxu0
          %v727 = vsub.f32 0.0, %v724
          %v728 = vld [vmem:[#allocation2] sm:$0xff]
          %v729 = vld [vmem:[#allocation2 + $0x8] sm:$0xff]
          %v730 = vld [vmem:[#allocation3] sm:$0xff]
          %732 = vset.pattern.permute.xlu0 0
          %733 = vperm.xlu0 %732, %v730
          %v734 = vpop.permute.xlu0 %733
          %v736 = vadd.f32 %v728, %v734
          %v737 = vmul.f32 %v736, 0.00390625
          %v738 = vld [vmem:[#allocation4] sm:$0xff]
          %v739 = vld [vmem:[%s390] sm:$0x1]
          %741 = vset.pattern.permute.xlu0 0
          %742 = vperm.xlu0 %741, %v738
          %v743 = vpop.permute.xlu0 %742
          %v746 = vlaneseq
          %v747 = vshrl.u32 %v746, 7
          %v748 = vsub.s32 0, %v747
          %v749 = vrot.slane %v739, %v748
          %v751 = vadd.f32 %v743, %v749
          %v752 = vmul.f32 %v729, 2.0
          %v753 = vadd.f32 %v752, 1.0
          %v754 = vadd.f32 %v751, 1.0
          %v755 = vrcp.pop %v754
          %v756 = vmul.f32 %v753, %v755
          %v757 = vsub.f32 1.0, %v756
          %v758 = vadd.f32 %v737, %v727
          %v759 = vadd.f32 %v758, %v757
          %760 = vst [vmem:[%s385] sm:$0xff] %v759
        $region64: #{tpu_custom_call.1} parent=39 // pred_fallthru
          _
        %s761 = sand.u32 %s182, 1
        %s762 = scalar_lea.sflag [#allocation7], %s761
        %s763 = sand.u32 %s182, 1
        %s764 = smul.addr %s763, 8
        %s765 = scalar_lea.vmem [#allocation13], %s764
        // Predicated region
        $region65: #{tpu_custom_call.1} parent=39 // pred_check
          %p766 = pneg %p192
        $region66: #{tpu_custom_call.1} parent=39 // pred_check_branch
          %768 = sbr.rel (%p766) target = $region68
        $region67: #{tpu_custom_call.1} parent=39 // pred_region
          %s770 = ssub.s32 128, 128
          %771 = vsyncadd %s762, %s770
          %s772 = smul.addr %s32, 128
          %s773 = scalar_lea.hbm %s5, %s772
          %s775 = sshll.u32 %s765, 4
          %s776 = int_to_ptr.vmem [resolvable:$true] %s775
          %778 = dma.vmem_to_hbm [thread:$0]  %s776, 128, %s773, %s762
        $region68: #{tpu_custom_call.1} parent=39 // pred_fallthru
          _
      $region40: #{tpu_custom_call.1} parent=5 // pred_fallthru
        _
      %p779 = scmp.le.s32.totalorder 2, %s23
      // Predicated region
      $region69: #{tpu_custom_call.1} parent=5 // pred_check
        %p780 = pneg %p779
      $region70: #{tpu_custom_call.1} parent=5 // pred_check_branch
        %782 = sbr.rel (%p780) target = $region72
      $region71: #{tpu_custom_call.1} parent=5 // pred_region
        %s783 = ssub.s32 %s23, 2
        // Predicated region
        $region73: #{tpu_custom_call.1} parent=71 // pred_check
          %p784 = pneg %p198
        $region74: #{tpu_custom_call.1} parent=71 // pred_check_branch
          %786 = sbr.rel (%p784) target = $region76
        $region75: #{tpu_custom_call.1} parent=71 // pred_region
          %s787 = sand.u32 %s183, 1
          %s788 = scalar_lea.sflag [#allocation7], %s787
          %s789 = sand.u32 %s183, 1
          %s790 = smul.addr %s789, 8
          %s791 = scalar_lea.vmem [#allocation13], %s790
          %792 = dma.done %s788, 128
        $region76: #{tpu_custom_call.1} parent=71 // pred_fallthru
          _
      $region72: #{tpu_custom_call.1} parent=5 // pred_fallthru
        _
    $region6: #{tpu_custom_call.1} parent=1 // loop_footer
      %s27 = sadd.s32 1, %s23
    $region7: #{tpu_custom_call.1} parent=1 // loop_footer_branch
      %22 = sbr.rel target = $region3
    $region8: #{tpu_custom_call.1} parent=1 // loop_exit
      _
    %793 = vsyncpa [#allocation6], 1
    %s794 = scalar_lea.sflag [#allocation6], 1
    %795 = vsyncpa %s794, 1
    %796 = vsyncpa [#allocation9], 1
    %s797 = scalar_lea.sflag [#allocation9], 1
    %798 = vsyncpa %s797, 1
    %799 = vsyncpa [#allocation12], 1
    %s800 = scalar_lea.sflag [#allocation12], 1
    %801 = vsyncpa %s800, 1
    %802 = vsyncpa [#allocation7], 1
    %s803 = scalar_lea.sflag [#allocation7], 1
    %804 = vsyncpa %s803, 1

</llo_original>
